<compile_context>
chip_gen: v7x
topology: tpu7x:2x2x1
jax: 0.10.0
libtpu: 0.0.40
codegen_flags: <defaults>
</compile_context>

<pallas_src>
import functools

import jax
import jax.numpy as jnp
from jax.experimental import pallas as pl
from jax.experimental.pallas import tpu as pltpu


def _upsampling_padzero_kernel(xyz_ref, feat_ref, anc_ref, out_ref,
                               found_ref, best_ref, *, tn, feat_resident):
    # xyz_ref  : (1, N, 3)   points, resident across the grid (coords last)
    # feat_ref : (1, C, N)   resident  OR  (1, C, tn) streamed per N-tile
    # anc_ref  : (1, 3, tm)  anchors, channels-first
    # out_ref  : (1, C, tm)  gathered+masked features (lane-dense in M)
    # found_ref: (1, tm) i32 per-anchor "already matched" flag
    # best_ref : (C, tm) f32 gathered-feature accumulator
    ni = pl.program_id(2)

    @pl.when(ni == 0)
    def _init():
        found_ref[...] = jnp.zeros(found_ref.shape, dtype=found_ref.dtype)
        best_ref[...] = jnp.zeros(best_ref.shape, dtype=best_ref.dtype)

    off = pl.multiple_of(ni * tn, tn)
    xyz = xyz_ref[0, pl.ds(off, tn), :]      # (tn, 3)
    anc = anc_ref[0]                         # (3, tm)
    tm = anc.shape[1]

    # Exact coordinate equality (identical to the reference's `==` test); an
    # exact match necessarily has the minimum (zero) distance, so no distance
    # computation is needed at all.
    eq = ((xyz[:, 0:1] == anc[0:1, :]) &
          (xyz[:, 1:2] == anc[1:2, :]) &
          (xyz[:, 2:3] == anc[2:3, :]))      # (tn, tm)

    # First matching row in this N-tile (first-index tie-break).
    row = jax.lax.broadcasted_iota(jnp.int32, (tn, tm), 0)
    cand = jnp.where(eq, row, tn)
    first = jnp.min(cand, axis=0, keepdims=True)        # (1, tm)

    # Only anchors that have not matched in an earlier (lower-index) N-tile.
    take_new = (first < tn) & (found_ref[...] == 0)     # (1, tm) bool
    new_count = jnp.sum(take_new.astype(jnp.int32), axis=1, keepdims=True)

    @pl.when(new_count[0, 0] > 0)
    def _gather():
        if feat_resident:
            feat = feat_ref[0, :, pl.ds(off, tn)]        # (C, tn)
        else:
            feat = feat_ref[0]                           # (C, tn)
        # One-hot gather of the first-match column on the MXU; 0/1 are exact
        # in the feature dtype (incl. bf16). Columns of non-new anchors are
        # all-zero, so the additive update needs no (C, tm) where-select.
        onehot = ((row == first) & take_new).astype(feat.dtype)   # (tn, tm)
        local = jnp.dot(feat, onehot,
                        preferred_element_type=jnp.float32)       # (C, tm)
        best_ref[...] = best_ref[...] + local
        found_ref[...] = jnp.where(take_new,
                                   jnp.ones(found_ref.shape, found_ref.dtype),
                                   found_ref[...])

    @pl.when(ni == pl.num_programs(2) - 1)
    def _finalize():
        # Anchors with no exact match never got a contribution -> stay zero.
        out_ref[0] = best_ref[...].astype(out_ref.dtype)


def _pick_tile(dim, candidates):
    for c in candidates:
        if dim % c == 0:
            return c
    return dim  # full-extent block (always legal)


def _vmem_capacity_bytes():
    try:
        info = pltpu.get_tpu_info()
        cap = getattr(info, "vmem_capacity_bytes", None)
        if cap:
            return int(cap)
    except Exception:
        pass
    return 64 * 1024 * 1024   # conservative (v7x per-core VMEM)


def upsampling_padzero(xyz, feature, xyz_anchor, *, tm=None, tn=None,
                       feat_resident=None):
    """xyz (B,3,N), feature (B,C,N), xyz_anchor (B,3,M)
       -> (xyz_anchor, feature_anchor (B,C,M))."""
    B, C, N = feature.shape
    M = xyz_anchor.shape[-1]
    assert xyz.shape == (B, 3, N), xyz.shape
    assert xyz_anchor.shape == (B, 3, M), xyz_anchor.shape

    itemsize = feature.dtype.itemsize
    vmem_cap = _vmem_capacity_bytes()
    budget = min(int(0.70 * vmem_cap), 100 * 1024 * 1024)

    if tm is None:
        tm = _pick_tile(M, (512, 256, 128))
        # v7x megacore: keep at least 2 programs on the 'parallel' grid axes.
        if B * (M // tm) < 2:
            for c in (256, 128):
                if M % c == 0 and B * (M // c) >= 2:
                    tm = c
                    break
    assert M % tm == 0, f"tm={tm} must divide M={M}"

    # Approximate steady-state VMEM use (incl. lane padding of the narrow
    # coordinate arrays); used only to choose residency / tile sizes.
    fixed = (2 * N * 512                   # resident (N,3) xyz, lanes pad to 128
             + 2 * 8 * max(tm, 128) * 4    # (3,tm) anchor, sublanes pad to 8
             + 2 * C * tm * itemsize       # out double-buffer
             + C * tm * 4 + tm * 4)        # scratch: best (f32) + found (i32)

    def _temps(t):                         # ~4 live (tn, tm) f32/i32 temporaries
        return 4 * t * tm * 4

    tn_cands = [c for c in (2048, 1024, 512, 256, 128) if c <= N and N % c == 0]
    if not tn_cands:
        tn_cands = [N]

    auto_res, auto_tn = False, None
    res_bytes = 2 * C * N * itemsize       # resident feature, double-buffered
    for c in tn_cands:                     # largest tn that fits with residency
        if fixed + res_bytes + _temps(c) <= budget:
            auto_res, auto_tn = True, c
            break
    if auto_tn is None:                    # streamed feature fallback
        for c in tn_cands:
            if fixed + 2 * C * c * itemsize + _temps(c) <= budget:
                auto_tn = c
                break
        if auto_tn is None:
            auto_tn = tn_cands[-1]
    if feat_resident is None:
        feat_resident = auto_res
    if tn is None:
        tn = auto_tn
    assert N % tn == 0, f"tn={tn} must divide N={N}"

    # Only the tiny coordinate array is transposed (coords-last so per-coord
    # columns broadcast naturally). Feature and output stay channels-first.
    xyz_t = jnp.transpose(xyz, (0, 2, 1))          # (B, N, 3)

    if feat_resident:
        feat_spec = pl.BlockSpec((1, C, N), lambda b, mi, ni: (b, 0, 0))
    else:
        feat_spec = pl.BlockSpec((1, C, tn), lambda b, mi, ni: (b, 0, ni))

    grid = (B, M // tm, N // tn)
    kernel = functools.partial(_upsampling_padzero_kernel,
                               tn=tn, feat_resident=feat_resident)

    feature_anchor = pl.pallas_call(
        kernel,
        out_shape=jax.ShapeDtypeStruct((B, C, M), feature.dtype),
        grid_spec=pltpu.PrefetchScalarGridSpec(
            num_scalar_prefetch=0,
            grid=grid,
            in_specs=[
                pl.BlockSpec((1, N, 3), lambda b, mi, ni: (b, 0, 0)),
                feat_spec,
                pl.BlockSpec((1, 3, tm), lambda b, mi, ni: (b, 0, mi)),
            ],
            out_specs=pl.BlockSpec((1, C, tm), lambda b, mi, ni: (b, 0, mi)),
            scratch_shapes=[
                pltpu.VMEM((1, tm), jnp.int32),     # per-anchor matched flag
                pltpu.VMEM((C, tm), jnp.float32),   # gathered-feature accum
            ],
        ),
        compiler_params=pltpu.CompilerParams(
            dimension_semantics=("parallel", "parallel", "arbitrary"),
            vmem_limit_bytes=min(int(0.85 * vmem_cap), 110 * 1024 * 1024),
        ),
    )(xyz_t, feature, xyz_anchor)

    return xyz_anchor, feature_anchor


def _reference(xyz, feature, xyz_anchor):
    """Pure-JAX reference mirroring the PyTorch forward."""
    xyz_t = jnp.transpose(xyz, (0, 2, 1))          # (B, N, 3)
    feat_t = jnp.transpose(feature, (0, 2, 1))     # (B, N, C)
    anc_t = jnp.transpose(xyz_anchor, (0, 2, 1))   # (B, M, 3)
    d2 = jnp.sum((anc_t[:, :, None, :] - xyz_t[:, None, :, :]) ** 2, axis=-1)
    idx = jnp.argmin(d2, axis=-1)                                        # (B,M)
    grouped_xyz = jnp.take_along_axis(xyz_t, idx[..., None], axis=1)     # (B,M,3)
    grouped_feat = jnp.take_along_axis(feat_t, idx[..., None], axis=1)   # (B,M,C)
    match = jnp.sum((grouped_xyz == anc_t).astype(jnp.int32), axis=-1) == 3
    feat_anchor_t = jnp.where(match[..., None], grouped_feat, 0.0)
    return xyz_anchor, jnp.transpose(feat_anchor_t, (0, 2, 1))


if __name__ == "__main__":
    B, C, N, M = 2, 8, 384, 256
    key = jax.random.PRNGKey(0)
    k1, k2, k3, k4, k5 = jax.random.split(key, 5)

    xyz = jax.random.normal(k1, (B, 3, N), dtype=jnp.float32)
    # Plant an exact duplicate point across different N-tiles to exercise the
    # first-index tie-break of the streaming first-match scan.
    xyz = xyz.at[:, :, 300].set(xyz[:, :, 10])
    feature = jax.random.normal(k2, (B, C, N), dtype=jnp.float32)

    # Anchors: first half exact copies of xyz points (features pass through),
    # second half perturbed points (features padded with zero).
    sel_exact = jax.random.randint(k3, (M // 2,), 0, N)
    sel_exact = sel_exact.at[0].set(10)            # anchor 0 hits the duplicate
    exact = jnp.take(xyz, sel_exact, axis=2)                        # (B,3,M/2)
    sel_pert = jax.random.randint(k4, (M - M // 2,), 0, N)
    perturbed = jnp.take(xyz, sel_pert, axis=2) + 0.05 * jax.random.normal(
        k5, (B, 3, M - M // 2), dtype=jnp.float32)
    xyz_anchor = jnp.concatenate([exact, perturbed], axis=-1)       # (B, 3, M)

    anc_exp, feat_exp = _reference(xyz, feature, xyz_anchor)

    # (a) auto-chosen tiles (feature-resident at these shapes)
    anc_a, feat_a = upsampling_padzero(xyz, feature, xyz_anchor)
    # (b) small tiles, resident feature -> multiple M/N tiles + in-kernel slice
    anc_b, feat_b = upsampling_padzero(xyz, feature, xyz_anchor,
                                       tm=128, tn=128, feat_resident=True)
    # (c) small tiles, streamed-feature fallback path
    anc_c, feat_c = upsampling_padzero(xyz, feature, xyz_anchor,
                                       tm=128, tn=128, feat_resident=False)
    jax.block_until_ready((feat_a, feat_b, feat_c))

    for anc_out, feat_out in ((anc_a, feat_a), (anc_b, feat_b), (anc_c, feat_c)):
        assert anc_out.shape == (B, 3, M) and feat_out.shape == (B, C, M)
        assert jnp.allclose(anc_out, anc_exp)
        assert jnp.allclose(feat_out, feat_exp, atol=1e-5)

    print("KERNEL_OK")
</pallas_src>

<mosaic_0001>
module attributes {stable_mosaic.version = 11 : i64} {
  func.func @_upsampling_padzero_kernel(%arg0: i32, %arg1: i32, %arg2: i32, %arg3: memref<1x384x3xf32, #tpu.memory_space<vmem>>, %arg4: memref<1x8x384xf32, #tpu.memory_space<vmem>>, %arg5: memref<1x3x256xf32, #tpu.memory_space<vmem>>, %arg6: memref<1x8x256xf32, #tpu.memory_space<vmem>>, %arg7: memref<1x256xi32, #tpu.memory_space<vmem>>, %arg8: memref<8x256xf32, #tpu.memory_space<vmem>>) attributes {dimension_semantics = [#tpu.dimension_semantics<parallel>, #tpu.dimension_semantics<parallel>, #tpu.dimension_semantics<arbitrary>], iteration_bounds = array<i64: 2, 1, 3>, scalar_prefetch = 0 : i64, scratch_operands = 2 : i64, tpu.core_type = #tpu.core_type<tc>, window_params = [{transform_indices = @transform_0, window_bounds = array<i64: 1, 384, 3>}, {transform_indices = @transform_1, window_bounds = array<i64: 1, 8, 384>}, {transform_indices = @transform_2, window_bounds = array<i64: 1, 3, 256>}, {transform_indices = @transform_3, window_bounds = array<i64: 1, 8, 256>}]} {
    %c0_i32 = arith.constant 0 : i32
    %0 = arith.cmpi eq, %arg2, %c0_i32 : i32
    %1 = arith.extui %0 : i1 to i32
    %c0_i32_0 = arith.constant 0 : i32
    %2 = arith.cmpi ne, %1, %c0_i32_0 : i32
    scf.if %2 {
      %c0_i32_14 = arith.constant 0 : i32
      %48 = vector.broadcast %c0_i32_14 : i32 to vector<1x256xi32>
      %c0_15 = arith.constant 0 : index
      %c0_16 = arith.constant 0 : index
      %49 = vector.load %arg7[%c0_15, %c0_16] : memref<1x256xi32, #tpu.memory_space<vmem>>, vector<1x256xi32>
      tpu.vector_store %arg7[%c0_15, %c0_16], %48 {strides = array<i32>} : memref<1x256xi32, #tpu.memory_space<vmem>>, vector<1x256xi32>,
      %cst_17 = arith.constant 0.000000e+00 : f32
      %50 = vector.broadcast %cst_17 : f32 to vector<8x256xf32>
      %c0_18 = arith.constant 0 : index
      %c0_19 = arith.constant 0 : index
      %51 = vector.load %arg8[%c0_18, %c0_19] : memref<8x256xf32, #tpu.memory_space<vmem>>, vector<8x256xf32>
      tpu.vector_store %arg8[%c0_18, %c0_19], %50 {strides = array<i32>} : memref<8x256xf32, #tpu.memory_space<vmem>>, vector<8x256xf32>,
    } else {
    }
    %c128_i32 = arith.constant 128 : i32
    %3 = arith.muli %arg2, %c128_i32 : i32
    %4 = tpu.assume_multiple %3, 128 : i32
    %c0 = arith.constant 0 : index
    %5 = arith.index_cast %4 : i32 to index
    %c0_1 = arith.constant 0 : index
    %6 = vector.load %arg3[%c0, %5, %c0_1] : memref<1x384x3xf32, #tpu.memory_space<vmem>>, vector<1x128x3xf32>
    %7 = vector.shape_cast %6 : vector<1x128x3xf32> to vector<128x3xf32>
    %c0_2 = arith.constant 0 : index
    %c0_3 = arith.constant 0 : index
    %c0_4 = arith.constant 0 : index
    %8 = vector.load %arg5[%c0_2, %c0_3, %c0_4] : memref<1x3x256xf32, #tpu.memory_space<vmem>>, vector<1x3x256xf32>
    %9 = vector.shape_cast %8 : vector<1x3x256xf32> to vector<3x256xf32>
    %10 = vector.extract_strided_slice %7 {offsets = [0, 0], sizes = [128, 1], strides = [1, 1]} : vector<128x3xf32> to vector<128x1xf32>
    %11 = vector.extract_strided_slice %9 {offsets = [0, 0], sizes = [1, 256], strides = [1, 1]} : vector<3x256xf32> to vector<1x256xf32>
    %12 = vector.broadcast %10 : vector<128x1xf32> to vector<128x256xf32>
    %13 = vector.broadcast %11 : vector<1x256xf32> to vector<128x256xf32>
    %14 = arith.cmpf oeq, %12, %13 : vector<128x256xf32>
    %15 = vector.extract_strided_slice %7 {offsets = [0, 1], sizes = [128, 1], strides = [1, 1]} : vector<128x3xf32> to vector<128x1xf32>
    %16 = vector.extract_strided_slice %9 {offsets = [1, 0], sizes = [1, 256], strides = [1, 1]} : vector<3x256xf32> to vector<1x256xf32>
    %17 = vector.broadcast %15 : vector<128x1xf32> to vector<128x256xf32>
    %18 = vector.broadcast %16 : vector<1x256xf32> to vector<128x256xf32>
    %19 = arith.cmpf oeq, %17, %18 : vector<128x256xf32>
    %20 = arith.andi %14, %19 : vector<128x256xi1>
    %21 = vector.extract_strided_slice %7 {offsets = [0, 2], sizes = [128, 1], strides = [1, 1]} : vector<128x3xf32> to vector<128x1xf32>
    %22 = vector.extract_strided_slice %9 {offsets = [2, 0], sizes = [1, 256], strides = [1, 1]} : vector<3x256xf32> to vector<1x256xf32>
    %23 = vector.broadcast %21 : vector<128x1xf32> to vector<128x256xf32>
    %24 = vector.broadcast %22 : vector<1x256xf32> to vector<128x256xf32>
    %25 = arith.cmpf oeq, %23, %24 : vector<128x256xf32>
    %26 = arith.andi %20, %25 : vector<128x256xi1>
    %27 = tpu.iota {dimensions = array<i32: 0>} : vector<128x256xi32>
    %c128_i32_5 = arith.constant 128 : i32
    %28 = vector.broadcast %c128_i32_5 : i32 to vector<128x256xi32>
    %29 = arith.select %26, %27, %28 : vector<128x256xi1>, vector<128x256xi32>
    %cst = arith.constant dense<2147483647> : vector<256xi32>
    %30 = vector.multi_reduction <minsi>, %29, %cst [0] : vector<128x256xi32> to vector<256xi32>
    %31 = vector.shape_cast %30 : vector<256xi32> to vector<1x256xi32>
    %c128_i32_6 = arith.constant 128 : i32
    %32 = vector.broadcast %c128_i32_6 : i32 to vector<1x256xi32>
    %33 = arith.cmpi slt, %31, %32 : vector<1x256xi32>
    %c0_7 = arith.constant 0 : index
    %c0_8 = arith.constant 0 : index
    %34 = vector.load %arg7[%c0_7, %c0_8] : memref<1x256xi32, #tpu.memory_space<vmem>>, vector<1x256xi32>
    %c0_i32_9 = arith.constant 0 : i32
    %35 = vector.broadcast %c0_i32_9 : i32 to vector<1x256xi32>
    %36 = arith.cmpi eq, %34, %35 : vector<1x256xi32>
    %37 = arith.andi %33, %36 : vector<1x256xi1>
    %38 = arith.extui %37 : vector<1x256xi1> to vector<1x256xi32>
    %cst_10 = arith.constant dense<0> : vector<1xi32>
    %39 = vector.multi_reduction <add>, %38, %cst_10 [1] : vector<1x256xi32> to vector<1xi32>
    %40 = vector.shape_cast %39 : vector<1xi32> to vector<1x1xi32>
    %41 = vector.extract %40[0, 0] : i32 from vector<1x1xi32>
    %c0_i32_11 = arith.constant 0 : i32
    %42 = arith.cmpi sgt, %41, %c0_i32_11 : i32
    %43 = arith.extui %42 : i1 to i32
    %c0_i32_12 = arith.constant 0 : i32
    %44 = arith.cmpi ne, %43, %c0_i32_12 : i32
    scf.if %44 {
      %c0_14 = arith.constant 0 : index
      %c0_15 = arith.constant 0 : index
      %48 = arith.index_cast %4 : i32 to index
      %49 = vector.load %arg4[%c0_14, %c0_15, %48] : memref<1x8x384xf32, #tpu.memory_space<vmem>>, vector<1x8x128xf32>
      %50 = vector.shape_cast %49 : vector<1x8x128xf32> to vector<8x128xf32>
      %51 = vector.broadcast %31 : vector<1x256xi32> to vector<128x256xi32>
      %52 = arith.cmpi eq, %27, %51 : vector<128x256xi32>
      %53 = vector.broadcast %37 : vector<1x256xi1> to vector<128x256xi1>
      %54 = arith.andi %52, %53 : vector<128x256xi1>
      %55 = arith.extui %54 : vector<128x256xi1> to vector<128x256xi32>
      %56 = arith.sitofp %55 : vector<128x256xi32> to vector<128x256xf32>
      %cst_16 = arith.constant dense<0.000000e+00> : vector<8x256xf32>
      %57 = tpu.matmul %50, %56, %cst_16 {dimension_numbers = #tpu.dot_dimension_numbers<[1], [0], [0], [1], [0, 0, 1, 1], [], []>} : vector<8x128xf32>, vector<128x256xf32>, vector<8x256xf32> -> vector<8x256xf32>
      %c0_17 = arith.constant 0 : index
      %c0_18 = arith.constant 0 : index
      %58 = vector.load %arg8[%c0_17, %c0_18] : memref<8x256xf32, #tpu.memory_space<vmem>>, vector<8x256xf32>
      %59 = arith.addf %58, %57 : vector<8x256xf32>
      %c0_19 = arith.constant 0 : index
      %c0_20 = arith.constant 0 : index
      %60 = vector.load %arg8[%c0_19, %c0_20] : memref<8x256xf32, #tpu.memory_space<vmem>>, vector<8x256xf32>
      tpu.vector_store %arg8[%c0_19, %c0_20], %59 {strides = array<i32>} : memref<8x256xf32, #tpu.memory_space<vmem>>, vector<8x256xf32>,
      %c1_i32 = arith.constant 1 : i32
      %61 = vector.broadcast %c1_i32 : i32 to vector<1x256xi32>
      %c0_21 = arith.constant 0 : index
      %c0_22 = arith.constant 0 : index
      %62 = vector.load %arg7[%c0_21, %c0_22] : memref<1x256xi32, #tpu.memory_space<vmem>>, vector<1x256xi32>
      %63 = arith.select %37, %61, %62 : vector<1x256xi1>, vector<1x256xi32>
      %c0_23 = arith.constant 0 : index
      %c0_24 = arith.constant 0 : index
      %64 = vector.load %arg7[%c0_23, %c0_24] : memref<1x256xi32, #tpu.memory_space<vmem>>, vector<1x256xi32>
      tpu.vector_store %arg7[%c0_23, %c0_24], %63 {strides = array<i32>} : memref<1x256xi32, #tpu.memory_space<vmem>>, vector<1x256xi32>,
    } else {
    }
    %c2_i32 = arith.constant 2 : i32
    %45 = arith.cmpi eq, %arg2, %c2_i32 : i32
    %46 = arith.extui %45 : i1 to i32
    %c0_i32_13 = arith.constant 0 : i32
    %47 = arith.cmpi ne, %46, %c0_i32_13 : i32
    scf.if %47 {
      %c0_14 = arith.constant 0 : index
      %c0_15 = arith.constant 0 : index
      %48 = vector.load %arg8[%c0_14, %c0_15] : memref<8x256xf32, #tpu.memory_space<vmem>>, vector<8x256xf32>
      %c0_16 = arith.constant 0 : index
      %c0_17 = arith.constant 0 : index
      %c0_18 = arith.constant 0 : index
      %49 = vector.load %arg6[%c0_16, %c0_17, %c0_18] : memref<1x8x256xf32, #tpu.memory_space<vmem>>, vector<1x8x256xf32>
      %50 = vector.shape_cast %49 : vector<1x8x256xf32> to vector<8x256xf32>
      %51 = vector.shape_cast %48 : vector<8x256xf32> to vector<1x8x256xf32>
      tpu.vector_store %arg6[%c0_16, %c0_17, %c0_18], %51 {strides = array<i32>} : memref<1x8x256xf32, #tpu.memory_space<vmem>>, vector<1x8x256xf32>,
    } else {
    }
    return
  }
  func.func @transform_0(%arg0: i32, %arg1: i32, %arg2: i32) -> (i32, i32, i32) {
    %c0_i32 = arith.constant 0 : i32
    %c0_i32_0 = arith.constant 0 : i32
    %c0_i32_1 = arith.constant 0 : i32
    return %arg0, %c0_i32, %c0_i32_0 : i32, i32, i32
  }
  func.func @transform_1(%arg0: i32, %arg1: i32, %arg2: i32) -> (i32, i32, i32) {
    %c0_i32 = arith.constant 0 : i32
    %c0_i32_0 = arith.constant 0 : i32
    %c0_i32_1 = arith.constant 0 : i32
    return %arg0, %c0_i32, %c0_i32_0 : i32, i32, i32
  }
  func.func @transform_2(%arg0: i32, %arg1: i32, %arg2: i32) -> (i32, i32, i32) {
    %c0_i32 = arith.constant 0 : i32
    %c0_i32_0 = arith.constant 0 : i32
    return %arg0, %c0_i32, %arg1 : i32, i32, i32
  }
  func.func @transform_3(%arg0: i32, %arg1: i32, %arg2: i32) -> (i32, i32, i32) {
    %c0_i32 = arith.constant 0 : i32
    %c0_i32_0 = arith.constant 0 : i32
    return %arg0, %c0_i32, %arg1 : i32, i32, i32
  }
}

</mosaic_0001>

<llo_original>
// kernel: tpu_custom_call.1
$region0: #{tpu_custom_call.1}
  #allocation0 [shape = 'u32[]', space=smem, size = 0x4, offset = 0x4, fixed_abs, tag = 'smem constant byte address 0x4 - core index']
  #allocation1 [shape = 'u32[144,128]{1,0:T(1,128)}', space=vmem, size = 0x12000, scoped, tag = 'internal scratch']
  #allocation2 [shape = 's32[1,256]{1,0:T(1,128)}', space=vmem, size = 0x400, scoped, tag = 'scratch operand']
  #allocation3 [shape = 'f32[8,256]{1,0:T(8,128)}', space=vmem, size = 0x2000, scoped, tag = 'scratch operand']
  %s0 = inlined_call_operand.vmem [shape: f32[2,384,3], index: 0, kind: input, shape index: {}]
  %s1 = inlined_call_operand.vmem [shape: f32[2,8,384], index: 1, kind: input, shape index: {}]
  %s2 = inlined_call_operand.vmem [shape: f32[2,3,256], index: 2, kind: input, shape index: {}]
  %s3 = inlined_call_operand.hbm [shape: f32[2,8,256], index: 3, kind: output, shape index: {}]
  %s4 = sld [smem:[#allocation0]]
  $region57: #{tpu_custom_call.1} parent=0
    _
  %s6 = ssub.s32 1, %s4
  %s7 = scalar_select 0, %s6, %s4
  $region1: #{tpu_custom_call.1} parent=0
    #allocation4 [shape = 'u8[16384]{0}', space=vmem, size = 0x4000, scoped, tag = 'output window, operand 0']
    #allocation5 [shape = 's32[2]{0}', space=sflag, size = 0x8, scoped, tag = 'scoped memory for tpu_custom_call.1']
    %8 = vsyncpa [#allocation5], 0
    %s9 = scalar_lea.sflag [#allocation5], 1
    %10 = vsyncpa %s9, 0
    loop: start=0, step=1, limit=8
    $region2: #{tpu_custom_call.1} parent=1 // loop_pre_header
      _
    $region3: #{tpu_custom_call.1} parent=1 // loop_header
      %s12 = sphi 0, %s16
      %p13 = scmp.ge.s32.totalorder %s12, 8
      %s19 = sphi 0, %s38
      %s20 = sphi 0, %s34
      %s21 = sphi 0, %s30
      %s22 = sphi 0, %s19
      %s23 = sphi 0, %s20
      %s24 = sphi 0, %s21
      %s25 = sphi 0, %s22
      %s26 = sphi 0, %s23
      %s27 = sphi 0, %s24
      %s41 = sphi 0, %s43
      %s44 = sphi 0, %s41
      %s45 = sphi 0, %s44
      %s61 = sphi 0, %s45
      %s67 = sphi 0, %s69
      %s70 = sphi 0, %s67
      %s71 = sphi 0, %s70
      %s87 = sphi 0, %s71
      %s95 = sphi 0, %s97
      %s98 = sphi 0, %s95
      %s99 = sphi 0, %s98
      %s115 = sphi 0, %s99
      %s123 = sphi 0, %s125
      %s126 = sphi 0, %s123
      %s127 = sphi 0, %s126
      %s143 = sphi 0, %s127
    $region4: #{tpu_custom_call.1} parent=1 // loop_header_branch
      %15 = sbr.rel (%p13) target = $region8
    $region5: #{tpu_custom_call.1} parent=1 // loop_body
      %s17 = ssub.s32 %s12, 1
      %s18 = ssub.s32 %s12, 2
      %s28 = sadd.s32 1, %s21
      %p29 = scmp.ge.s32.totalorder %s28, 3
      %s30 = scalar_select %p29, 0, %s28
      %s31 = sadd.s32 1, %s20
      %s32 = scalar_select %p29, %s31, %s20
      %p33 = scmp.ge.s32.totalorder %s32, 1
      %s34 = scalar_select %p33, 0, %s32
      %s35 = sadd.s32 1, %s19
      %s36 = scalar_select %p33, %s35, %s19
      %p37 = scmp.ge.s32.totalorder %s36, 2
      %s38 = scalar_select %p37, 0, %s36
      %s39 = ssub.s32 %s19, %s38
      %p40 = scmp.eq.s32.totalorder %s39, 0
      %s42 = sadd.s32 %s41, 1
      %s43 = scalar_select %p40, %s41, %s42
      %p46 = pneg %p40
      %p47 = scmp.eq.s32.totalorder %s12, 5
      %p48 = por %p46, %p47
      %p49 = scmp.ne.s32.totalorder %s41, %s44
      %p50 = scmp.eq.s32.totalorder %s12, 0
      %p51 = por %p49, %p50
      %p52 = scmp.ne.s32.totalorder %s41, %s44
      %p53 = scmp.eq.s32.totalorder %s17, 5
      %p54 = por %p52, %p53
      %p55 = scmp.ne.s32.totalorder %s44, %s45
      %p56 = scmp.eq.s32.totalorder %s17, 0
      %p57 = por %p55, %p56
      %p58 = scmp.ne.s32.totalorder %s44, %s45
      %p59 = scmp.eq.s32.totalorder %s18, 5
      %p60 = por %p58, %p59
      %p62 = scmp.ne.s32.totalorder %s45, %s61
      %p63 = scmp.eq.s32.totalorder %s18, 0
      %p64 = por %p62, %p63
      %s65 = ssub.s32 %s19, %s38
      %p66 = scmp.eq.s32.totalorder %s65, 0
      %s68 = sadd.s32 %s67, 1
      %s69 = scalar_select %p66, %s67, %s68
      %p72 = pneg %p66
      %p73 = scmp.eq.s32.totalorder %s12, 5
      %p74 = por %p72, %p73
      %p75 = scmp.ne.s32.totalorder %s67, %s70
      %p76 = scmp.eq.s32.totalorder %s12, 0
      %p77 = por %p75, %p76
      %p78 = scmp.ne.s32.totalorder %s67, %s70
      %p79 = scmp.eq.s32.totalorder %s17, 5
      %p80 = por %p78, %p79
      %p81 = scmp.ne.s32.totalorder %s70, %s71
      %p82 = scmp.eq.s32.totalorder %s17, 0
      %p83 = por %p81, %p82
      %p84 = scmp.ne.s32.totalorder %s70, %s71
      %p85 = scmp.eq.s32.totalorder %s18, 5
      %p86 = por %p84, %p85
      %p88 = scmp.ne.s32.totalorder %s71, %s87
      %p89 = scmp.eq.s32.totalorder %s18, 0
      %p90 = por %p88, %p89
      %s91 = ssub.s32 %s19, %s38
      %s92 = ssub.s32 %s20, %s34
      %s93 = sor.u32 %s91, %s92
      %p94 = scmp.eq.s32.totalorder %s93, 0
      %s96 = sadd.s32 %s95, 1
      %s97 = scalar_select %p94, %s95, %s96
      %p100 = pneg %p94
      %p101 = scmp.eq.s32.totalorder %s12, 5
      %p102 = por %p100, %p101
      %p103 = scmp.ne.s32.totalorder %s95, %s98
      %p104 = scmp.eq.s32.totalorder %s12, 0
      %p105 = por %p103, %p104
      %p106 = scmp.ne.s32.totalorder %s95, %s98
      %p107 = scmp.eq.s32.totalorder %s17, 5
      %p108 = por %p106, %p107
      %p109 = scmp.ne.s32.totalorder %s98, %s99
      %p110 = scmp.eq.s32.totalorder %s17, 0
      %p111 = por %p109, %p110
      %p112 = scmp.ne.s32.totalorder %s98, %s99
      %p113 = scmp.eq.s32.totalorder %s18, 5
      %p114 = por %p112, %p113
      %p116 = scmp.ne.s32.totalorder %s99, %s115
      %p117 = scmp.eq.s32.totalorder %s18, 0
      %p118 = por %p116, %p117
      %s119 = ssub.s32 %s19, %s38
      %s120 = ssub.s32 %s20, %s34
      %s121 = sor.u32 %s119, %s120
      %p122 = scmp.eq.s32.totalorder %s121, 0
      %s124 = sadd.s32 %s123, 1
      %s125 = scalar_select %p122, %s123, %s124
      %p128 = pneg %p122
      %p129 = scmp.eq.s32.totalorder %s12, 5
      %p130 = por %p128, %p129
      %p131 = scmp.ne.s32.totalorder %s123, %s126
      %p132 = scmp.eq.s32.totalorder %s12, 0
      %p133 = por %p131, %p132
      %p134 = scmp.ne.s32.totalorder %s123, %s126
      %p135 = scmp.eq.s32.totalorder %s17, 5
      %p136 = por %p134, %p135
      %p137 = scmp.ne.s32.totalorder %s126, %s127
      %p138 = scmp.eq.s32.totalorder %s17, 0
      %p139 = por %p137, %p138
      %p140 = scmp.ne.s32.totalorder %s126, %s127
      %p141 = scmp.eq.s32.totalorder %s18, 5
      %p142 = por %p140, %p141
      %p144 = scmp.ne.s32.totalorder %s127, %s143
      %p145 = scmp.eq.s32.totalorder %s18, 0
      %p146 = por %p144, %p145
      %p147 = scmp.le.s32.totalorder 1, %s12
      %p148 = scmp.lt.s32.totalorder %s12, 7
      %p149 = pnand %p147, %p148
      %p150 = pneg %p149
      // Predicated region
      $region9: #{tpu_custom_call.1} parent=5 // pred_check
        _
      $region10: #{tpu_custom_call.1} parent=5 // pred_check_branch
        %152 = sbr.rel (%p149) target = $region12
      $region11: #{tpu_custom_call.1} parent=5 // pred_region
        %s153 = ssub.s32 %s12, 1
      $region12: #{tpu_custom_call.1} parent=5 // pred_fallthru
        _
      %p154 = scmp.lt.s32.totalorder %s12, 6
      // Predicated region
      $region13: #{tpu_custom_call.1} parent=5 // pred_check
        %p155 = pneg %p154
      $region14: #{tpu_custom_call.1} parent=5 // pred_check_branch
        %157 = sbr.rel (%p155) target = $region16
      $region15: #{tpu_custom_call.1} parent=5 // pred_region
        // Predicated region
        $region17: #{tpu_custom_call.1} parent=15 // pred_check
          %p158 = pneg %p51
        $region18: #{tpu_custom_call.1} parent=15 // pred_check_branch
          %160 = sbr.rel (%p158) target = $region20
        $region19: #{tpu_custom_call.1} parent=15 // pred_region
          %p161 = scmp.lt.s32.totalorder %s19, 1
          %s162 = scalar_select %p161, %s19, 1
          %s163 = smul.addr %s162, 48
          %s164 = smul.addr %s163, 8
          %s165 = scalar_lea.vmem %s0, %s164
        $region20: #{tpu_custom_call.1} parent=15 // pred_fallthru
          _
        // Predicated region
        $region21: #{tpu_custom_call.1} parent=15 // pred_check
          %p166 = pneg %p77
        $region22: #{tpu_custom_call.1} parent=15 // pred_check_branch
          %168 = sbr.rel (%p166) target = $region24
        $region23: #{tpu_custom_call.1} parent=15 // pred_region
          %p169 = scmp.lt.s32.totalorder %s19, 1
          %s170 = scalar_select %p169, %s19, 1
          %s171 = smul.addr %s170, 3
          %s172 = smul.addr %s171, 8
          %s173 = scalar_lea.vmem %s1, %s172
        $region24: #{tpu_custom_call.1} parent=15 // pred_fallthru
          _
        // Predicated region
        $region25: #{tpu_custom_call.1} parent=15 // pred_check
          %p174 = pneg %p105
        $region26: #{tpu_custom_call.1} parent=15 // pred_check_branch
          %176 = sbr.rel (%p174) target = $region28
        $region27: #{tpu_custom_call.1} parent=15 // pred_region
          %s177 = smul.u32 2, %s20
          %p178 = scmp.lt.s32.totalorder %s19, 1
          %s179 = scalar_select %p178, %s19, 1
          %p180 = scmp.lt.s32.totalorder %s177, 1
          %s181 = scalar_select %p180, %s177, 1
          %s182 = smul.addr %s179, 2
          %s183 = sadd.s32 %s181, %s182
          %s184 = smul.addr %s183, 4
          %s185 = scalar_lea.vmem %s2, %s184
          %s186 = smul.u32 2, %s20
        $region28: #{tpu_custom_call.1} parent=15 // pred_fallthru
          _
      $region16: #{tpu_custom_call.1} parent=5 // pred_fallthru
        _
      %p187 = scmp.le.s32.totalorder 1, %s12
      %p188 = scmp.lt.s32.totalorder %s12, 7
      %p189 = pnand %p187, %p188
      %p190 = pneg %p189
      // Predicated region
      $region29: #{tpu_custom_call.1} parent=5 // pred_check
        _
      $region30: #{tpu_custom_call.1} parent=5 // pred_check_branch
        %192 = sbr.rel (%p189) target = $region32
      $region31: #{tpu_custom_call.1} parent=5 // pred_region
        %s193 = ssub.s32 %s12, 1
        %p194 = scmp.lt.s32.totalorder %s22, 1
        %s195 = scalar_select %p194, %s22, 1
        %s196 = smul.addr %s195, 48
        %s197 = smul.addr %s196, 8
        %s198 = scalar_lea.vmem %s0, %s197
        %p199 = pneg %p57
        %p200 = pneg %p54
        %p201 = scmp.lt.s32.totalorder %s22, 1
        %s202 = scalar_select %p201, %s22, 1
        %s203 = smul.addr %s202, 3
        %s204 = smul.addr %s203, 8
        %s205 = scalar_lea.vmem %s1, %s204
        %p206 = pneg %p83
        %p207 = pneg %p80
        %s208 = smul.u32 2, %s23
        %p209 = scmp.lt.s32.totalorder %s22, 1
        %s210 = scalar_select %p209, %s22, 1
        %p211 = scmp.lt.s32.totalorder %s208, 1
        %s212 = scalar_select %p211, %s208, 1
        %s213 = smul.addr %s210, 2
        %s214 = sadd.s32 %s212, %s213
        %s215 = smul.addr %s214, 4
        %s216 = scalar_lea.vmem %s2, %s215
        %p217 = pneg %p111
        %p218 = pneg %p108
        %p219 = pneg %p139
        %p220 = pneg %p136
        %s221 = sand.u32 %s126, 1
        %s222 = scalar_lea.sflag [#allocation5], %s221
        %s223 = sand.u32 %s126, 1
        %s224 = smul.addr %s223, 16
        %s225 = scalar_lea.vmem [#allocation4], %s224
        %p226 = scmp.lt.s32.totalorder %s22, 1
        %s227 = scalar_select %p226, %s22, 1
        %s228 = smul.addr %s227, 48
        %s229 = smul.addr %s228, 8
        %s230 = scalar_lea.vmem %s0, %s229
        %p231 = scmp.lt.s32.totalorder %s22, 1
        %s232 = scalar_select %p231, %s22, 1
        %s233 = smul.addr %s232, 3
        %s234 = smul.addr %s233, 8
        %s235 = scalar_lea.vmem %s1, %s234
        %s236 = smul.u32 2, %s23
        %p237 = scmp.lt.s32.totalorder %s22, 1
        %s238 = scalar_select %p237, %s22, 1
        %p239 = scmp.lt.s32.totalorder %s236, 1
        %s240 = scalar_select %p239, %s236, 1
        %s241 = smul.addr %s238, 2
        %s242 = sadd.s32 %s240, %s241
        %s243 = smul.addr %s242, 4
        %s244 = scalar_lea.vmem %s2, %s243
        %s245 = smul.u32 2, %s23
        %s246 = smul.u32 2, %s23
        %p247 = scmp.eq.s32.totalorder %s24, 0
        // Predicated region
        $region33: #{tpu_custom_call.1} parent=31 // pred_check
          %p248 = pneg %p247
        $region34: #{tpu_custom_call.1} parent=31 // pred_check_branch
          %250 = sbr.rel (%p248) target = $region36
        $region35: #{tpu_custom_call.1} parent=31 // pred_region
          %v251 = vlaneseq
          %vm252 = vcmp.ge.s32.totalorder %v251, 0
          %vm253 = vcmp.lt.s32.totalorder %v251, 256
          %vm254 = vmand %vm252, %vm253
          %255 = vst.msk [vmem:[#allocation2] sm:$0x3] %vm254, 0
          %256 = vst [vmem:[#allocation3] sm:$0xff] 0.0
          %257 = vst [vmem:[#allocation3 + $0x8] sm:$0xff] 0.0
        $region36: #{tpu_custom_call.1} parent=31 // pred_fallthru
          _
        %s258 = smul.u32 %s24, 128
        %s259 = scalar_lea.vmem %s230, %s258
        %v260 = vld [vmem:[%s259] sm:$0xff]
        %v261 = vld [vmem:[%s259 + $0x8] sm:$0xff]
        %v262 = vld [vmem:[%s259 + $0x10] sm:$0xff]
        %v263 = vld [vmem:[%s259 + $0x18] sm:$0xff]
        %v264 = vld [vmem:[%s259 + $0x20] sm:$0xff]
        %v265 = vld [vmem:[%s259 + $0x28] sm:$0xff]
        %v266 = vld [vmem:[%s259 + $0x30] sm:$0xff]
        %v267 = vld [vmem:[%s259 + $0x38] sm:$0xff]
        %v268 = vld [vmem:[%s259 + $0x40] sm:$0xff]
        %v269 = vld [vmem:[%s259 + $0x48] sm:$0xff]
        %v270 = vld [vmem:[%s259 + $0x50] sm:$0xff]
        %v271 = vld [vmem:[%s259 + $0x58] sm:$0xff]
        %v272 = vld [vmem:[%s259 + $0x60] sm:$0xff]
        %v273 = vld [vmem:[%s259 + $0x68] sm:$0xff]
        %v274 = vld [vmem:[%s259 + $0x70] sm:$0xff]
        %v275 = vld [vmem:[%s259 + $0x78] sm:$0xff]
        %v276 = vld [vmem:[%s244] sm:$0x77]
        %278 = vset.pattern.permute.xlu0 0
        %279 = vperm.xlu0 %278, %v260
        %v280 = vpop.permute.xlu0 %279
        %283 = vset.pattern.permute.xlu0 0
        %284 = vperm.xlu0 %283, %v261
        %v285 = vpop.permute.xlu0 %284
        %288 = vset.pattern.permute.xlu0 0
        %289 = vperm.xlu0 %288, %v262
        %v290 = vpop.permute.xlu0 %289
        %293 = vset.pattern.permute.xlu0 0
        %294 = vperm.xlu0 %293, %v263
        %v295 = vpop.permute.xlu0 %294
        %298 = vset.pattern.permute.xlu0 0
        %299 = vperm.xlu0 %298, %v264
        %v300 = vpop.permute.xlu0 %299
        %303 = vset.pattern.permute.xlu0 0
        %304 = vperm.xlu0 %303, %v265
        %v305 = vpop.permute.xlu0 %304
        %308 = vset.pattern.permute.xlu0 0
        %309 = vperm.xlu0 %308, %v266
        %v310 = vpop.permute.xlu0 %309
        %313 = vset.pattern.permute.xlu0 0
        %314 = vperm.xlu0 %313, %v267
        %v315 = vpop.permute.xlu0 %314
        %318 = vset.pattern.permute.xlu0 0
        %319 = vperm.xlu0 %318, %v268
        %v320 = vpop.permute.xlu0 %319
        %323 = vset.pattern.permute.xlu0 0
        %324 = vperm.xlu0 %323, %v269
        %v325 = vpop.permute.xlu0 %324
        %328 = vset.pattern.permute.xlu0 0
        %329 = vperm.xlu0 %328, %v270
        %v330 = vpop.permute.xlu0 %329
        %333 = vset.pattern.permute.xlu0 0
        %334 = vperm.xlu0 %333, %v271
        %v335 = vpop.permute.xlu0 %334
        %338 = vset.pattern.permute.xlu0 0
        %339 = vperm.xlu0 %338, %v272
        %v340 = vpop.permute.xlu0 %339
        %343 = vset.pattern.permute.xlu0 0
        %344 = vperm.xlu0 %343, %v273
        %v345 = vpop.permute.xlu0 %344
        %348 = vset.pattern.permute.xlu0 0
        %349 = vperm.xlu0 %348, %v274
        %v350 = vpop.permute.xlu0 %349
        %353 = vset.pattern.permute.xlu0 0
        %354 = vperm.xlu0 %353, %v275
        %v355 = vpop.permute.xlu0 %354
        %v358 = vlaneseq
        %v359 = vshrl.u32 %v358, 7
        %v360 = vsub.s32 0, %v359
        %v361 = vrot.slane %v276, %v360
        %v362 = vlaneseq
        %v363 = vshrl.u32 %v362, 7
        %v364 = vsub.s32 4, %v363
        %v365 = vrot.slane %v276, %v364
        %v368 = vlaneseq
        %v369 = vshrl.u32 %v368, 7
        %v370 = vsub.s32 0, %v369
        %v371 = vrot.slane %v361, %v370
        %v372 = vlaneseq
        %v373 = vshrl.u32 %v372, 7
        %v374 = vsub.s32 0, %v373
        %v375 = vrot.slane %v365, %v374
        %vm376 = vcmp.eq.f32.partialorder %v280, %v371
        %vm377 = vcmp.eq.f32.partialorder %v280, %v375
        %vm378 = vcmp.eq.f32.partialorder %v285, %v371
        %vm379 = vcmp.eq.f32.partialorder %v285, %v375
        %vm380 = vcmp.eq.f32.partialorder %v290, %v371
        %vm381 = vcmp.eq.f32.partialorder %v290, %v375
        %vm382 = vcmp.eq.f32.partialorder %v295, %v371
        %vm383 = vcmp.eq.f32.partialorder %v295, %v375
        %vm384 = vcmp.eq.f32.partialorder %v300, %v371
        %vm385 = vcmp.eq.f32.partialorder %v300, %v375
        %vm386 = vcmp.eq.f32.partialorder %v305, %v371
        %vm387 = vcmp.eq.f32.partialorder %v305, %v375
        %vm388 = vcmp.eq.f32.partialorder %v310, %v371
        %vm389 = vcmp.eq.f32.partialorder %v310, %v375
        %vm390 = vcmp.eq.f32.partialorder %v315, %v371
        %vm391 = vcmp.eq.f32.partialorder %v315, %v375
        %vm392 = vcmp.eq.f32.partialorder %v320, %v371
        %vm393 = vcmp.eq.f32.partialorder %v320, %v375
        %vm394 = vcmp.eq.f32.partialorder %v325, %v371
        %vm395 = vcmp.eq.f32.partialorder %v325, %v375
        %vm396 = vcmp.eq.f32.partialorder %v330, %v371
        %vm397 = vcmp.eq.f32.partialorder %v330, %v375
        %vm398 = vcmp.eq.f32.partialorder %v335, %v371
        %vm399 = vcmp.eq.f32.partialorder %v335, %v375
        %vm400 = vcmp.eq.f32.partialorder %v340, %v371
        %vm401 = vcmp.eq.f32.partialorder %v340, %v375
        %vm402 = vcmp.eq.f32.partialorder %v345, %v371
        %vm403 = vcmp.eq.f32.partialorder %v345, %v375
        %vm404 = vcmp.eq.f32.partialorder %v350, %v371
        %vm405 = vcmp.eq.f32.partialorder %v350, %v375
        %vm406 = vcmp.eq.f32.partialorder %v355, %v371
        %vm407 = vcmp.eq.f32.partialorder %v355, %v375
        %408 = vset.pattern.permute.xlu0 1
        %409 = vperm.xlu0 %408, %v260
        %v410 = vpop.permute.xlu0 %409
        %412 = vset.pattern.permute.xlu0 1
        %413 = vperm.xlu0 %412, %v261
        %v414 = vpop.permute.xlu0 %413
        %416 = vset.pattern.permute.xlu0 1
        %417 = vperm.xlu0 %416, %v262
        %v418 = vpop.permute.xlu0 %417
        %420 = vset.pattern.permute.xlu0 1
        %421 = vperm.xlu0 %420, %v263
        %v422 = vpop.permute.xlu0 %421
        %424 = vset.pattern.permute.xlu0 1
        %425 = vperm.xlu0 %424, %v264
        %v426 = vpop.permute.xlu0 %425
        %428 = vset.pattern.permute.xlu0 1
        %429 = vperm.xlu0 %428, %v265
        %v430 = vpop.permute.xlu0 %429
        %432 = vset.pattern.permute.xlu0 1
        %433 = vperm.xlu0 %432, %v266
        %v434 = vpop.permute.xlu0 %433
        %436 = vset.pattern.permute.xlu0 1
        %437 = vperm.xlu0 %436, %v267
        %v438 = vpop.permute.xlu0 %437
        %440 = vset.pattern.permute.xlu0 1
        %441 = vperm.xlu0 %440, %v268
        %v442 = vpop.permute.xlu0 %441
        %444 = vset.pattern.permute.xlu0 1
        %445 = vperm.xlu0 %444, %v269
        %v446 = vpop.permute.xlu0 %445
        %448 = vset.pattern.permute.xlu0 1
        %449 = vperm.xlu0 %448, %v270
        %v450 = vpop.permute.xlu0 %449
        %452 = vset.pattern.permute.xlu0 1
        %453 = vperm.xlu0 %452, %v271
        %v454 = vpop.permute.xlu0 %453
        %456 = vset.pattern.permute.xlu0 1
        %457 = vperm.xlu0 %456, %v272
        %v458 = vpop.permute.xlu0 %457
        %460 = vset.pattern.permute.xlu0 1
        %461 = vperm.xlu0 %460, %v273
        %v462 = vpop.permute.xlu0 %461
        %464 = vset.pattern.permute.xlu0 1
        %465 = vperm.xlu0 %464, %v274
        %v466 = vpop.permute.xlu0 %465
        %468 = vset.pattern.permute.xlu0 1
        %469 = vperm.xlu0 %468, %v275
        %v470 = vpop.permute.xlu0 %469
        %v472 = vlaneseq
        %v473 = vshrl.u32 %v472, 7
        %v474 = vsub.s32 1, %v473
        %v475 = vrot.slane %v276, %v474
        %v476 = vlaneseq
        %v477 = vshrl.u32 %v476, 7
        %v478 = vsub.s32 5, %v477
        %v479 = vrot.slane %v276, %v478
        %v482 = vlaneseq
        %v483 = vshrl.u32 %v482, 7
        %v484 = vsub.s32 1, %v483
        %v485 = vrot.slane %v475, %v484
        %v486 = vlaneseq
        %v487 = vshrl.u32 %v486, 7
        %v488 = vsub.s32 1, %v487
        %v489 = vrot.slane %v479, %v488
        %vm490 = vcmp.eq.f32.partialorder %v410, %v485
        %vm491 = vcmp.eq.f32.partialorder %v410, %v489
        %vm492 = vcmp.eq.f32.partialorder %v414, %v485
        %vm493 = vcmp.eq.f32.partialorder %v414, %v489
        %vm494 = vcmp.eq.f32.partialorder %v418, %v485
        %vm495 = vcmp.eq.f32.partialorder %v418, %v489
        %vm496 = vcmp.eq.f32.partialorder %v422, %v485
        %vm497 = vcmp.eq.f32.partialorder %v422, %v489
        %vm498 = vcmp.eq.f32.partialorder %v426, %v485
        %vm499 = vcmp.eq.f32.partialorder %v426, %v489
        %vm500 = vcmp.eq.f32.partialorder %v430, %v485
        %vm501 = vcmp.eq.f32.partialorder %v430, %v489
        %vm502 = vcmp.eq.f32.partialorder %v434, %v485
        %vm503 = vcmp.eq.f32.partialorder %v434, %v489
        %vm504 = vcmp.eq.f32.partialorder %v438, %v485
        %vm505 = vcmp.eq.f32.partialorder %v438, %v489
        %vm506 = vcmp.eq.f32.partialorder %v442, %v485
        %vm507 = vcmp.eq.f32.partialorder %v442, %v489
        %vm508 = vcmp.eq.f32.partialorder %v446, %v485
        %vm509 = vcmp.eq.f32.partialorder %v446, %v489
        %vm510 = vcmp.eq.f32.partialorder %v450, %v485
        %vm511 = vcmp.eq.f32.partialorder %v450, %v489
        %vm512 = vcmp.eq.f32.partialorder %v454, %v485
        %vm513 = vcmp.eq.f32.partialorder %v454, %v489
        %vm514 = vcmp.eq.f32.partialorder %v458, %v485
        %vm515 = vcmp.eq.f32.partialorder %v458, %v489
        %vm516 = vcmp.eq.f32.partialorder %v462, %v485
        %vm517 = vcmp.eq.f32.partialorder %v462, %v489
        %vm518 = vcmp.eq.f32.partialorder %v466, %v485
        %vm519 = vcmp.eq.f32.partialorder %v466, %v489
        %vm520 = vcmp.eq.f32.partialorder %v470, %v485
        %vm521 = vcmp.eq.f32.partialorder %v470, %v489
        %vm522 = vmand %vm376, %vm490
        %vm523 = vmand %vm377, %vm491
        %vm524 = vmand %vm378, %vm492
        %vm525 = vmand %vm379, %vm493
        %vm526 = vmand %vm380, %vm494
        %vm527 = vmand %vm381, %vm495
        %vm528 = vmand %vm382, %vm496
        %vm529 = vmand %vm383, %vm497
        %vm530 = vmand %vm384, %vm498
        %vm531 = vmand %vm385, %vm499
        %vm532 = vmand %vm386, %vm500
        %vm533 = vmand %vm387, %vm501
        %vm534 = vmand %vm388, %vm502
        %vm535 = vmand %vm389, %vm503
        %vm536 = vmand %vm390, %vm504
        %vm537 = vmand %vm391, %vm505
        %vm538 = vmand %vm392, %vm506
        %vm539 = vmand %vm393, %vm507
        %vm540 = vmand %vm394, %vm508
        %vm541 = vmand %vm395, %vm509
        %vm542 = vmand %vm396, %vm510
        %vm543 = vmand %vm397, %vm511
        %vm544 = vmand %vm398, %vm512
        %vm545 = vmand %vm399, %vm513
        %vm546 = vmand %vm400, %vm514
        %vm547 = vmand %vm401, %vm515
        %vm548 = vmand %vm402, %vm516
        %vm549 = vmand %vm403, %vm517
        %vm550 = vmand %vm404, %vm518
        %vm551 = vmand %vm405, %vm519
        %vm552 = vmand %vm406, %vm520
        %vm553 = vmand %vm407, %vm521
        %554 = vset.pattern.permute.xlu0 2
        %555 = vperm.xlu0 %554, %v260
        %v556 = vpop.permute.xlu0 %555
        %558 = vset.pattern.permute.xlu0 2
        %559 = vperm.xlu0 %558, %v261
        %v560 = vpop.permute.xlu0 %559
        %562 = vset.pattern.permute.xlu0 2
        %563 = vperm.xlu0 %562, %v262
        %v564 = vpop.permute.xlu0 %563
        %566 = vset.pattern.permute.xlu0 2
        %567 = vperm.xlu0 %566, %v263
        %v568 = vpop.permute.xlu0 %567
        %570 = vset.pattern.permute.xlu0 2
        %571 = vperm.xlu0 %570, %v264
        %v572 = vpop.permute.xlu0 %571
        %574 = vset.pattern.permute.xlu0 2
        %575 = vperm.xlu0 %574, %v265
        %v576 = vpop.permute.xlu0 %575
        %578 = vset.pattern.permute.xlu0 2
        %579 = vperm.xlu0 %578, %v266
        %v580 = vpop.permute.xlu0 %579
        %582 = vset.pattern.permute.xlu0 2
        %583 = vperm.xlu0 %582, %v267
        %v584 = vpop.permute.xlu0 %583
        %586 = vset.pattern.permute.xlu0 2
        %587 = vperm.xlu0 %586, %v268
        %v588 = vpop.permute.xlu0 %587
        %590 = vset.pattern.permute.xlu0 2
        %591 = vperm.xlu0 %590, %v269
        %v592 = vpop.permute.xlu0 %591
        %594 = vset.pattern.permute.xlu0 2
        %595 = vperm.xlu0 %594, %v270
        %v596 = vpop.permute.xlu0 %595
        %598 = vset.pattern.permute.xlu0 2
        %599 = vperm.xlu0 %598, %v271
        %v600 = vpop.permute.xlu0 %599
        %602 = vset.pattern.permute.xlu0 2
        %603 = vperm.xlu0 %602, %v272
        %v604 = vpop.permute.xlu0 %603
        %606 = vset.pattern.permute.xlu0 2
        %607 = vperm.xlu0 %606, %v273
        %v608 = vpop.permute.xlu0 %607
        %610 = vset.pattern.permute.xlu0 2
        %611 = vperm.xlu0 %610, %v274
        %v612 = vpop.permute.xlu0 %611
        %614 = vset.pattern.permute.xlu0 2
        %615 = vperm.xlu0 %614, %v275
        %v616 = vpop.permute.xlu0 %615
        %v618 = vlaneseq
        %v619 = vshrl.u32 %v618, 7
        %v620 = vsub.s32 2, %v619
        %v621 = vrot.slane %v276, %v620
        %v622 = vlaneseq
        %v623 = vshrl.u32 %v622, 7
        %v624 = vsub.s32 6, %v623
        %v625 = vrot.slane %v276, %v624
        %v628 = vlaneseq
        %v629 = vshrl.u32 %v628, 7
        %v630 = vsub.s32 2, %v629
        %v631 = vrot.slane %v621, %v630
        %v632 = vlaneseq
        %v633 = vshrl.u32 %v632, 7
        %v634 = vsub.s32 2, %v633
        %v635 = vrot.slane %v625, %v634
        %vm636 = vcmp.eq.f32.partialorder %v556, %v631
        %vm637 = vcmp.eq.f32.partialorder %v556, %v635
        %vm638 = vcmp.eq.f32.partialorder %v560, %v631
        %vm639 = vcmp.eq.f32.partialorder %v560, %v635
        %vm640 = vcmp.eq.f32.partialorder %v564, %v631
        %vm641 = vcmp.eq.f32.partialorder %v564, %v635
        %vm642 = vcmp.eq.f32.partialorder %v568, %v631
        %vm643 = vcmp.eq.f32.partialorder %v568, %v635
        %vm644 = vcmp.eq.f32.partialorder %v572, %v631
        %vm645 = vcmp.eq.f32.partialorder %v572, %v635
        %vm646 = vcmp.eq.f32.partialorder %v576, %v631
        %vm647 = vcmp.eq.f32.partialorder %v576, %v635
        %vm648 = vcmp.eq.f32.partialorder %v580, %v631
        %vm649 = vcmp.eq.f32.partialorder %v580, %v635
        %vm650 = vcmp.eq.f32.partialorder %v584, %v631
        %vm651 = vcmp.eq.f32.partialorder %v584, %v635
        %vm652 = vcmp.eq.f32.partialorder %v588, %v631
        %vm653 = vcmp.eq.f32.partialorder %v588, %v635
        %vm654 = vcmp.eq.f32.partialorder %v592, %v631
        %vm655 = vcmp.eq.f32.partialorder %v592, %v635
        %vm656 = vcmp.eq.f32.partialorder %v596, %v631
        %vm657 = vcmp.eq.f32.partialorder %v596, %v635
        %vm658 = vcmp.eq.f32.partialorder %v600, %v631
        %vm659 = vcmp.eq.f32.partialorder %v600, %v635
        %vm660 = vcmp.eq.f32.partialorder %v604, %v631
        %vm661 = vcmp.eq.f32.partialorder %v604, %v635
        %vm662 = vcmp.eq.f32.partialorder %v608, %v631
        %vm663 = vcmp.eq.f32.partialorder %v608, %v635
        %vm664 = vcmp.eq.f32.partialorder %v612, %v631
        %vm665 = vcmp.eq.f32.partialorder %v612, %v635
        %vm666 = vcmp.eq.f32.partialorder %v616, %v631
        %vm667 = vcmp.eq.f32.partialorder %v616, %v635
        %vm668 = vmand %vm522, %vm636
        %vm669 = vmand %vm523, %vm637
        %vm670 = vmand %vm524, %vm638
        %vm671 = vmand %vm525, %vm639
        %vm672 = vmand %vm526, %vm640
        %vm673 = vmand %vm527, %vm641
        %vm674 = vmand %vm528, %vm642
        %vm675 = vmand %vm529, %vm643
        %vm676 = vmand %vm530, %vm644
        %vm677 = vmand %vm531, %vm645
        %vm678 = vmand %vm532, %vm646
        %vm679 = vmand %vm533, %vm647
        %vm680 = vmand %vm534, %vm648
        %vm681 = vmand %vm535, %vm649
        %vm682 = vmand %vm536, %vm650
        %vm683 = vmand %vm537, %vm651
        %vm684 = vmand %vm538, %vm652
        %vm685 = vmand %vm539, %vm653
        %vm686 = vmand %vm540, %vm654
        %vm687 = vmand %vm541, %vm655
        %vm688 = vmand %vm542, %vm656
        %vm689 = vmand %vm543, %vm657
        %vm690 = vmand %vm544, %vm658
        %vm691 = vmand %vm545, %vm659
        %vm692 = vmand %vm546, %vm660
        %vm693 = vmand %vm547, %vm661
        %vm694 = vmand %vm548, %vm662
        %vm695 = vmand %vm549, %vm663
        %vm696 = vmand %vm550, %vm664
        %vm697 = vmand %vm551, %vm665
        %vm698 = vmand %vm552, %vm666
        %vm699 = vmand %vm553, %vm667
        %v700 = vlaneseq
        %v701 = vshrl.u32 %v700, 7
        %v702 = vadd.s32 %v701, 8
        %v703 = vadd.s32 %v701, 16
        %v704 = vadd.s32 %v701, 24
        %v705 = vadd.s32 %v701, 32
        %v706 = vadd.s32 %v701, 40
        %v707 = vadd.s32 %v701, 48
        %v708 = vadd.s32 %v701, 56
        %v709 = vadd.s32 %v701, 64
        %v710 = vadd.s32 %v701, 72
        %v711 = vadd.s32 %v701, 80
        %v712 = vadd.s32 %v701, 88
        %v713 = vadd.s32 %v701, 96
        %v714 = vadd.s32 %v701, 104
        %v715 = vadd.s32 %v701, 112
        %v716 = vadd.s32 %v701, 120
        %v717 = vsel %vm668, %v701, 128
        %v718 = vsel %vm669, %v701, 128
        %v719 = vsel %vm670, %v702, 128
        %v720 = vsel %vm671, %v702, 128
        %v721 = vsel %vm672, %v703, 128
        %v722 = vsel %vm673, %v703, 128
        %v723 = vsel %vm674, %v704, 128
        %v724 = vsel %vm675, %v704, 128
        %v725 = vsel %vm676, %v705, 128
        %v726 = vsel %vm677, %v705, 128
        %v727 = vsel %vm678, %v706, 128
        %v728 = vsel %vm679, %v706, 128
        %v729 = vsel %vm680, %v707, 128
        %v730 = vsel %vm681, %v707, 128
        %v731 = vsel %vm682, %v708, 128
        %v732 = vsel %vm683, %v708, 128
        %v733 = vsel %vm684, %v709, 128
        %v734 = vsel %vm685, %v709, 128
        %v735 = vsel %vm686, %v710, 128
        %v736 = vsel %vm687, %v710, 128
        %v737 = vsel %vm688, %v711, 128
        %v738 = vsel %vm689, %v711, 128
        %v739 = vsel %vm690, %v712, 128
        %v740 = vsel %vm691, %v712, 128
        %v741 = vsel %vm692, %v713, 128
        %v742 = vsel %vm693, %v713, 128
        %v743 = vsel %vm694, %v714, 128
        %v744 = vsel %vm695, %v714, 128
        %v745 = vsel %vm696, %v715, 128
        %v746 = vsel %vm697, %v715, 128
        %v747 = vsel %vm698, %v716, 128
        %v748 = vsel %vm699, %v716, 128
        %vm749 = vcmp.lt.s32.totalorder %v717, %v721
        %v750 = vsel %vm749, %v717, %v721
        %vm751 = vcmp.lt.s32.totalorder %v719, %v723
        %v752 = vsel %vm751, %v719, %v723
        %vm753 = vcmp.lt.s32.totalorder %v750, %v725
        %v754 = vsel %vm753, %v750, %v725
        %vm755 = vcmp.lt.s32.totalorder %v752, %v727
        %v756 = vsel %vm755, %v752, %v727
        %vm757 = vcmp.lt.s32.totalorder %v754, %v729
        %v758 = vsel %vm757, %v754, %v729
        %vm759 = vcmp.lt.s32.totalorder %v756, %v731
        %v760 = vsel %vm759, %v756, %v731
        %vm761 = vcmp.lt.s32.totalorder %v758, %v733
        %v762 = vsel %vm761, %v758, %v733
        %vm763 = vcmp.lt.s32.totalorder %v760, %v735
        %v764 = vsel %vm763, %v760, %v735
        %vm765 = vcmp.lt.s32.totalorder %v762, %v737
        %v766 = vsel %vm765, %v762, %v737
        %vm767 = vcmp.lt.s32.totalorder %v764, %v739
        %v768 = vsel %vm767, %v764, %v739
        %vm769 = vcmp.lt.s32.totalorder %v766, %v741
        %v770 = vsel %vm769, %v766, %v741
        %vm771 = vcmp.lt.s32.totalorder %v768, %v743
        %v772 = vsel %vm771, %v768, %v743
        %vm773 = vcmp.lt.s32.totalorder %v770, %v745
        %v774 = vsel %vm773, %v770, %v745
        %vm775 = vcmp.lt.s32.totalorder %v772, %v747
        %v776 = vsel %vm775, %v772, %v747
        %vm777 = vcmp.lt.s32.totalorder %v774, %v776
        %v778 = vsel %vm777, %v774, %v776
        %v779 = vrot.slane %v778, 4
        %vm780 = vcmp.lt.s32.totalorder %v778, %v779
        %v781 = vsel %vm780, %v778, %v779
        %v782 = vrot.slane %v781, 2
        %vm783 = vcmp.lt.s32.totalorder %v781, %v782
        %v784 = vsel %vm783, %v781, %v782
        %v785 = vrot.slane %v784, 1
        %vm786 = vcmp.lt.s32.totalorder %v784, %v785
        %v787 = vsel %vm786, %v784, %v785
        %vm788 = vcmp.lt.s32.totalorder %v718, %v722
        %v789 = vsel %vm788, %v718, %v722
        %vm790 = vcmp.lt.s32.totalorder %v720, %v724
        %v791 = vsel %vm790, %v720, %v724
        %vm792 = vcmp.lt.s32.totalorder %v789, %v726
        %v793 = vsel %vm792, %v789, %v726
        %vm794 = vcmp.lt.s32.totalorder %v791, %v728
        %v795 = vsel %vm794, %v791, %v728
        %vm796 = vcmp.lt.s32.totalorder %v793, %v730
        %v797 = vsel %vm796, %v793, %v730
        %vm798 = vcmp.lt.s32.totalorder %v795, %v732
        %v799 = vsel %vm798, %v795, %v732
        %vm800 = vcmp.lt.s32.totalorder %v797, %v734
        %v801 = vsel %vm800, %v797, %v734
        %vm802 = vcmp.lt.s32.totalorder %v799, %v736
        %v803 = vsel %vm802, %v799, %v736
        %vm804 = vcmp.lt.s32.totalorder %v801, %v738
        %v805 = vsel %vm804, %v801, %v738
        %vm806 = vcmp.lt.s32.totalorder %v803, %v740
        %v807 = vsel %vm806, %v803, %v740
        %vm808 = vcmp.lt.s32.totalorder %v805, %v742
        %v809 = vsel %vm808, %v805, %v742
        %vm810 = vcmp.lt.s32.totalorder %v807, %v744
        %v811 = vsel %vm810, %v807, %v744
        %vm812 = vcmp.lt.s32.totalorder %v809, %v746
        %v813 = vsel %vm812, %v809, %v746
        %vm814 = vcmp.lt.s32.totalorder %v811, %v748
        %v815 = vsel %vm814, %v811, %v748
        %vm816 = vcmp.lt.s32.totalorder %v813, %v815
        %v817 = vsel %vm816, %v813, %v815
        %v818 = vrot.slane %v817, 4
        %vm819 = vcmp.lt.s32.totalorder %v817, %v818
        %v820 = vsel %vm819, %v817, %v818
        %v821 = vrot.slane %v820, 2
        %vm822 = vcmp.lt.s32.totalorder %v820, %v821
        %v823 = vsel %vm822, %v820, %v821
        %v824 = vrot.slane %v823, 1
        %vm825 = vcmp.lt.s32.totalorder %v823, %v824
        %v826 = vsel %vm825, %v823, %v824
        %vm827 = vcmp.lt.s32.totalorder %v787, 128
        %vm828 = vcmp.lt.s32.totalorder %v826, 128
        %v829 = vld [vmem:[#allocation2] sm:$0x3]
        %vm830 = vcmp.eq.s32.totalorder %v829, 0
        %v831 = vsel %vm830, 1, 0
        %v832 = vlaneseq
        %v833 = vshrl.u32 %v832, 7
        %v834 = vsub.s32 0, %v833
        %v835 = vrot.slane %v831, %v834
        %v836 = vlaneseq
        %v837 = vshrl.u32 %v836, 7
        %v838 = vsub.s32 1, %v837
        %v839 = vrot.slane %v831, %v838
        %vm840 = vcmp.ne.s32.totalorder %v835, 0
        %vm841 = vcmp.ne.s32.totalorder %v839, 0
        %vm842 = vmand %vm827, %vm840
        %vm843 = vmand %vm828, %vm841
        %v844 = vsel %vm842, 1, 0
        %v845 = vsel %vm843, 1, 0
        %vm846 = vcmask 1040384
        %v847 = vsel %vm846, %v844, 0
        %v848 = vsel %vm846, %v845, 0
        %v849 = vadd.s32 %v847, %v848
        %v850 = vand.u32 %v849, 65535
        %v851 = vshrl.u32 %v849, 16
        %v852 = vcvt.s32.f32 %v850
        %v853 = vcvt.s32.f32 %v851
        %854 = vadd.xlane.f32.xlu0 %v852
        %v855 = vpop.xlane.xlu0 %854
        %856 = vadd.xlane.f32.xlu0 %v853
        %v857 = vpop.xlane.xlu0 %856
        %v858 = vcvt.f32.s32 %v855
        %v859 = vcvt.f32.s32 %v857
        %v860 = vshll.u32 %v859, 16
        %v861 = vadd.s32 %v860, %v858
        %s862 = vtos %v861
        %p863 = scmp.gt.s32.totalorder %s862, 0
        // Predicated region
        $region37: #{tpu_custom_call.1} parent=31 // pred_check
          %p864 = pneg %p863
        $region38: #{tpu_custom_call.1} parent=31 // pred_check_branch
          %866 = sbr.rel (%p864) target = $region40
        $region39: #{tpu_custom_call.1} parent=31 // pred_region
          %s867 = sshra.s32 %s258, 7
          %s868 = sand.u32 %s258, 127
          %s869 = smul.addr %s867, 8
          %s870 = scalar_lea.vmem %s235, %s869
          %v871 = vld [vmem:[%s870] sm:$0xff]
          %vm872 = vcmp.eq.s32.totalorder %v701, %v787
          %vm873 = vcmp.eq.s32.totalorder %v701, %v826
          %vm874 = vcmp.eq.s32.totalorder %v702, %v787
          %vm875 = vcmp.eq.s32.totalorder %v702, %v826
          %vm876 = vcmp.eq.s32.totalorder %v703, %v787
          %vm877 = vcmp.eq.s32.totalorder %v703, %v826
          %vm878 = vcmp.eq.s32.totalorder %v704, %v787
          %vm879 = vcmp.eq.s32.totalorder %v704, %v826
          %vm880 = vcmp.eq.s32.totalorder %v705, %v787
          %vm881 = vcmp.eq.s32.totalorder %v705, %v826
          %vm882 = vcmp.eq.s32.totalorder %v706, %v787
          %vm883 = vcmp.eq.s32.totalorder %v706, %v826
          %vm884 = vcmp.eq.s32.totalorder %v707, %v787
          %vm885 = vcmp.eq.s32.totalorder %v707, %v826
          %vm886 = vcmp.eq.s32.totalorder %v708, %v787
          %vm887 = vcmp.eq.s32.totalorder %v708, %v826
          %vm888 = vcmp.eq.s32.totalorder %v709, %v787
          %vm889 = vcmp.eq.s32.totalorder %v709, %v826
          %vm890 = vcmp.eq.s32.totalorder %v710, %v787
          %vm891 = vcmp.eq.s32.totalorder %v710, %v826
          %vm892 = vcmp.eq.s32.totalorder %v711, %v787
          %vm893 = vcmp.eq.s32.totalorder %v711, %v826
          %vm894 = vcmp.eq.s32.totalorder %v712, %v787
          %vm895 = vcmp.eq.s32.totalorder %v712, %v826
          %vm896 = vcmp.eq.s32.totalorder %v713, %v787
          %vm897 = vcmp.eq.s32.totalorder %v713, %v826
          %vm898 = vcmp.eq.s32.totalorder %v714, %v787
          %vm899 = vcmp.eq.s32.totalorder %v714, %v826
          %vm900 = vcmp.eq.s32.totalorder %v715, %v787
          %vm901 = vcmp.eq.s32.totalorder %v715, %v826
          %vm902 = vcmp.eq.s32.totalorder %v716, %v787
          %vm903 = vcmp.eq.s32.totalorder %v716, %v826
          %v904 = vlaneseq
          %v905 = vshrl.u32 %v904, 7
          %v906 = vsub.s32 0, %v905
          %v907 = vrot.slane %v844, %v906
          %v908 = vlaneseq
          %v909 = vshrl.u32 %v908, 7
          %v910 = vsub.s32 0, %v909
          %v911 = vrot.slane %v845, %v910
          %vm912 = vcmp.eq.s32.totalorder %v907, 1
          %vm913 = vcmp.eq.s32.totalorder %v911, 1
          %vm914 = vmand %vm872, %vm912
          %vm915 = vmand %vm873, %vm913
          %vm916 = vmand %vm874, %vm912
          %vm917 = vmand %vm875, %vm913
          %vm918 = vmand %vm876, %vm912
          %vm919 = vmand %vm877, %vm913
          %vm920 = vmand %vm878, %vm912
          %vm921 = vmand %vm879, %vm913
          %vm922 = vmand %vm880, %vm912
          %vm923 = vmand %vm881, %vm913
          %vm924 = vmand %vm882, %vm912
          %vm925 = vmand %vm883, %vm913
          %vm926 = vmand %vm884, %vm912
          %vm927 = vmand %vm885, %vm913
          %vm928 = vmand %vm886, %vm912
          %vm929 = vmand %vm887, %vm913
          %vm930 = vmand %vm888, %vm912
          %vm931 = vmand %vm889, %vm913
          %vm932 = vmand %vm890, %vm912
          %vm933 = vmand %vm891, %vm913
          %vm934 = vmand %vm892, %vm912
          %vm935 = vmand %vm893, %vm913
          %vm936 = vmand %vm894, %vm912
          %vm937 = vmand %vm895, %vm913
          %vm938 = vmand %vm896, %vm912
          %vm939 = vmand %vm897, %vm913
          %vm940 = vmand %vm898, %vm912
          %vm941 = vmand %vm899, %vm913
          %vm942 = vmand %vm900, %vm912
          %vm943 = vmand %vm901, %vm913
          %vm944 = vmand %vm902, %vm912
          %vm945 = vmand %vm903, %vm913
          %v946 = vsel %vm914, 1, 0
          %v947 = vsel %vm915, 1, 0
          %v948 = vsel %vm916, 1, 0
          %v949 = vsel %vm917, 1, 0
          %v950 = vsel %vm918, 1, 0
          %v951 = vsel %vm919, 1, 0
          %v952 = vsel %vm920, 1, 0
          %v953 = vsel %vm921, 1, 0
          %v954 = vsel %vm922, 1, 0
          %v955 = vsel %vm923, 1, 0
          %v956 = vsel %vm924, 1, 0
          %v957 = vsel %vm925, 1, 0
          %v958 = vsel %vm926, 1, 0
          %v959 = vsel %vm927, 1, 0
          %v960 = vsel %vm928, 1, 0
          %v961 = vsel %vm929, 1, 0
          %v962 = vsel %vm930, 1, 0
          %v963 = vsel %vm931, 1, 0
          %v964 = vsel %vm932, 1, 0
          %v965 = vsel %vm933, 1, 0
          %v966 = vsel %vm934, 1, 0
          %v967 = vsel %vm935, 1, 0
          %v968 = vsel %vm936, 1, 0
          %v969 = vsel %vm937, 1, 0
          %v970 = vsel %vm938, 1, 0
          %v971 = vsel %vm939, 1, 0
          %v972 = vsel %vm940, 1, 0
          %v973 = vsel %vm941, 1, 0
          %v974 = vsel %vm942, 1, 0
          %v975 = vsel %vm943, 1, 0
          %v976 = vsel %vm944, 1, 0
          %v977 = vsel %vm945, 1, 0
          %v978 = vcvt.s32.f32 %v946
          %v979 = vcvt.s32.f32 %v947
          %v980 = vcvt.s32.f32 %v948
          %v981 = vcvt.s32.f32 %v949
          %v982 = vcvt.s32.f32 %v950
          %v983 = vcvt.s32.f32 %v951
          %v984 = vcvt.s32.f32 %v952
          %v985 = vcvt.s32.f32 %v953
          %v986 = vcvt.s32.f32 %v954
          %v987 = vcvt.s32.f32 %v955
          %v988 = vcvt.s32.f32 %v956
          %v989 = vcvt.s32.f32 %v957
          %v990 = vcvt.s32.f32 %v958
          %v991 = vcvt.s32.f32 %v959
          %v992 = vcvt.s32.f32 %v960
          %v993 = vcvt.s32.f32 %v961
          %v994 = vcvt.s32.f32 %v962
          %v995 = vcvt.s32.f32 %v963
          %v996 = vcvt.s32.f32 %v964
          %v997 = vcvt.s32.f32 %v965
          %v998 = vcvt.s32.f32 %v966
          %v999 = vcvt.s32.f32 %v967
          %v1000 = vcvt.s32.f32 %v968
          %v1001 = vcvt.s32.f32 %v969
          %v1002 = vcvt.s32.f32 %v970
          %v1003 = vcvt.s32.f32 %v971
          %v1004 = vcvt.s32.f32 %v972
          %v1005 = vcvt.s32.f32 %v973
          %v1006 = vcvt.s32.f32 %v974
          %v1007 = vcvt.s32.f32 %v975
          %v1008 = vcvt.s32.f32 %v976
          %v1009 = vcvt.s32.f32 %v977
          %1010 = vmatprep.subr.mxu0 %v979
          %1011 = vmatpush1.msra.mxu0 %v978
          %1012 = vmatprep.subr.mxu0 %v981
          %1013 = vmatpush1.msra.mxu0 %v980
          %1014 = vmatprep.subr.mxu0 %v983
          %1015 = vmatpush1.msra.mxu0 %v982
          %1016 = vmatprep.subr.mxu0 %v985
          %1017 = vmatpush1.msra.mxu0 %v984
          %1018 = vmatprep.subr.mxu0 %v987
          %1019 = vmatpush1.msra.mxu0 %v986
          %1020 = vmatprep.subr.mxu0 %v989
          %1021 = vmatpush1.msra.mxu0 %v988
          %1022 = vmatprep.subr.mxu0 %v991
          %1023 = vmatpush1.msra.mxu0 %v990
          %1024 = vmatprep.subr.mxu0 %v993
          %1025 = vmatpush1.msra.mxu0 %v992
          %1026 = vmatprep.subr.mxu0 %v995
          %1027 = vmatpush1.msra.mxu0 %v994
          %1028 = vmatprep.subr.mxu0 %v997
          %1029 = vmatpush1.msra.mxu0 %v996
          %1030 = vmatprep.subr.mxu0 %v999
          %1031 = vmatpush1.msra.mxu0 %v998
          %1032 = vmatprep.subr.mxu0 %v1001
          %1033 = vmatpush1.msra.mxu0 %v1000
          %1034 = vmatprep.subr.mxu0 %v1003
          %1035 = vmatpush1.msra.mxu0 %v1002
          %1036 = vmatprep.subr.mxu0 %v1005
          %1037 = vmatpush1.msra.mxu0 %v1004
          %1038 = vmatprep.subr.mxu0 %v1007
          %1039 = vmatpush1.msra.mxu0 %v1006
          %1040 = vmatprep.subr.mxu0 %v1009
          %1041 = vmatpush1.msra.mxu0 %v1008
          %1042 = vmatprep.subr.mxu0 0.0
          %1043 = vmatpush1.msra.mxu0 0.0
          %1044 = vmatprep.subr.mxu0 0.0
          %1045 = vmatpush1.msra.mxu0 0.0
          %1046 = vmatprep.subr.mxu0 0.0
          %1047 = vmatpush1.msra.mxu0 0.0
          %1048 = vmatprep.subr.mxu0 0.0
          %1049 = vmatpush1.msra.mxu0 0.0
          %1050 = vmatprep.subr.mxu0 0.0
          %1051 = vmatpush1.msra.mxu0 0.0
          %1052 = vmatprep.subr.mxu0 0.0
          %1053 = vmatpush1.msra.mxu0 0.0
          %1054 = vmatprep.subr.mxu0 0.0
          %1055 = vmatpush1.msra.mxu0 0.0
          %1056 = vmatprep.subr.mxu0 0.0
          %1057 = vmatpush1.msra.mxu0 0.0
          %1058 = vmatprep.subr.mxu0 0.0
          %1059 = vmatpush1.msra.mxu0 0.0
          %1060 = vmatprep.subr.mxu0 0.0
          %1061 = vmatpush1.msra.mxu0 0.0
          %1062 = vmatprep.subr.mxu0 0.0
          %1063 = vmatpush1.msra.mxu0 0.0
          %1064 = vmatprep.subr.mxu0 0.0
          %1065 = vmatpush1.msra.mxu0 0.0
          %1066 = vmatprep.subr.mxu0 0.0
          %1067 = vmatpush1.msra.mxu0 0.0
          %1068 = vmatprep.subr.mxu0 0.0
          %1069 = vmatpush1.msra.mxu0 0.0
          %1070 = vmatprep.subr.mxu0 0.0
          %1071 = vmatpush1.msra.mxu0 0.0
          %1072 = vmatprep.subr.mxu0 0.0
          %1073 = vmatpush1.msra.mxu0 0.0
          %1074 = vmatprep.mubr.f32.mxu0 0.0
          %1075 = vmatmul.mubr.f32.gmra.mrb[0].mxu0 %v871
          %v1076 = vpop.f32.mrb[0].mxu0
          %v1077 = vadd.f32 0.0, %v1076
          %v1078 = vpop.f32.mrb[0].mxu0
          %v1079 = vadd.f32 0.0, %v1078
          %1080 = vdwg.mxu0
          %v1081 = vld [vmem:[#allocation3] sm:$0xff]
          %v1082 = vld [vmem:[#allocation3 + $0x8] sm:$0xff]
          %v1083 = vadd.f32 %v1081, %v1077
          %v1084 = vadd.f32 %v1082, %v1079
          %1085 = vst [vmem:[#allocation3] sm:$0xff] %v1083
          %1086 = vst [vmem:[#allocation3 + $0x8] sm:$0xff] %v1084
          %v1087 = vld [vmem:[#allocation2] sm:$0x3]
          %v1088 = vlaneseq
          %v1089 = vshrl.u32 %v1088, 7
          %v1090 = vsub.s32 0, %v1089
          %v1091 = vrot.slane %v1087, %v1090
          %v1092 = vlaneseq
          %v1093 = vshrl.u32 %v1092, 7
          %v1094 = vsub.s32 1, %v1093
          %v1095 = vrot.slane %v1087, %v1094
          %v1096 = vsel %vm842, 1, %v1091
          %v1097 = vsel %vm843, 1, %v1095
          %v1098 = vcombine.low %v1096, %v1097
          %v1100 = vunpack.c.l.s4 1966171168
          %v1101 = vunpack.c.0.s8 %v1100
          %v1102 = vlaneseq
          %v1103 = vshrl.u32 %v1102, 7
          %v1104 = vsub.s32 %v1101, %v1103
          %v1105 = vrot.slane %v1098, %v1104
          %v1107 = vunpack.c.l.s4 1966171168
          %v1108 = vunpack.c.0.s8 %v1107
          %v1109 = vlaneseq
          %v1110 = vshrl.u32 %v1109, 7
          %v1111 = vsub.s32 %v1108, %v1110
          %v1112 = vrot.slane %v1105, %v1111
          %v1113 = vlaneseq
          %vm1114 = vcmp.ge.s32.totalorder %v1113, 0
          %vm1115 = vcmp.lt.s32.totalorder %v1113, 256
          %vm1116 = vmand %vm1114, %vm1115
          %1117 = vst.msk [vmem:[#allocation2] sm:$0x3] %vm1116, %v1112
        $region40: #{tpu_custom_call.1} parent=31 // pred_fallthru
          _
        %p1118 = scmp.eq.s32.totalorder %s24, 2
        // Predicated region
        $region41: #{tpu_custom_call.1} parent=31 // pred_check
          %p1119 = pneg %p1118
        $region42: #{tpu_custom_call.1} parent=31 // pred_check_branch
          %1121 = sbr.rel (%p1119) target = $region44
        $region43: #{tpu_custom_call.1} parent=31 // pred_region
          %v1122 = vld [vmem:[#allocation3] sm:$0xff]
          %v1123 = vld [vmem:[#allocation3 + $0x8] sm:$0xff]
          %1124 = vst [vmem:[%s225] sm:$0xff] %v1122
          %1125 = vst [vmem:[%s225 + $0x8] sm:$0xff] %v1123
        $region44: #{tpu_custom_call.1} parent=31 // pred_fallthru
          _
        %s1126 = sand.u32 %s126, 1
        %s1127 = scalar_lea.sflag [#allocation5], %s1126
        %s1128 = sand.u32 %s126, 1
        %s1129 = smul.addr %s1128, 16
        %s1130 = scalar_lea.vmem [#allocation4], %s1129
        // Predicated region
        $region45: #{tpu_custom_call.1} parent=31 // pred_check
          %p1131 = pneg %p136
        $region46: #{tpu_custom_call.1} parent=31 // pred_check_branch
          %1133 = sbr.rel (%p1131) target = $region48
        $region47: #{tpu_custom_call.1} parent=31 // pred_region
          %s1134 = smul.u32 2, %s23
          %s1136 = ssub.s32 256, 256
          %1137 = vsyncadd %s1127, %s1136
          %s1138 = smul.addr %s22, 2
          %s1139 = sadd.s32 %s1134, %s1138
          %s1140 = smul.addr %s1139, 128
          %s1141 = scalar_lea.hbm %s3, %s1140
          %s1143 = sshll.u32 %s1130, 4
          %s1144 = int_to_ptr.vmem [resolvable:$true] %s1143
          %1146 = dma.vmem_to_hbm [thread:$0]  %s1144, 256, %s1141, %s1127
        $region48: #{tpu_custom_call.1} parent=31 // pred_fallthru
          _
      $region32: #{tpu_custom_call.1} parent=5 // pred_fallthru
        _
      %p1147 = scmp.le.s32.totalorder 2, %s12
      // Predicated region
      $region49: #{tpu_custom_call.1} parent=5 // pred_check
        %p1148 = pneg %p1147
      $region50: #{tpu_custom_call.1} parent=5 // pred_check_branch
        %1150 = sbr.rel (%p1148) target = $region52
      $region51: #{tpu_custom_call.1} parent=5 // pred_region
        %s1151 = ssub.s32 %s12, 2
        // Predicated region
        $region53: #{tpu_custom_call.1} parent=51 // pred_check
          %p1152 = pneg %p142
        $region54: #{tpu_custom_call.1} parent=51 // pred_check_branch
          %1154 = sbr.rel (%p1152) target = $region56
        $region55: #{tpu_custom_call.1} parent=51 // pred_region
          %s1155 = sand.u32 %s127, 1
          %s1156 = scalar_lea.sflag [#allocation5], %s1155
          %s1157 = sand.u32 %s127, 1
          %s1158 = smul.addr %s1157, 16
          %s1159 = scalar_lea.vmem [#allocation4], %s1158
          %1160 = dma.done %s1156, 256
        $region56: #{tpu_custom_call.1} parent=51 // pred_fallthru
          _
      $region52: #{tpu_custom_call.1} parent=5 // pred_fallthru
        _
    $region6: #{tpu_custom_call.1} parent=1 // loop_footer
      %s16 = sadd.s32 1, %s12
    $region7: #{tpu_custom_call.1} parent=1 // loop_footer_branch
      %11 = sbr.rel target = $region3
    $region8: #{tpu_custom_call.1} parent=1 // loop_exit
      _
    %1161 = vsyncpa [#allocation5], 1
    %s1162 = scalar_lea.sflag [#allocation5], 1
    %1163 = vsyncpa %s1162, 1

</llo_original>
